<compile_context>
chip_gen: v7x
topology: tpu7x:2x2x1
jax: 0.10.0
libtpu: 0.0.40
codegen_flags: <defaults>
</compile_context>

<pallas_src>
import jax
import jax.numpy as jnp
from jax.experimental import pallas as pl
from jax.experimental.pallas import tpu as pltpu

EPS = 1e-5


def _bn_tanh(y, g, b, inv_l):
    """Fused BatchNorm1d (batch stats, biased var) + affine + tanh, all f32."""
    s = jnp.sum(y, axis=1, keepdims=True)
    ss = jnp.sum(y * y, axis=1, keepdims=True)
    mean = s * inv_l
    var = ss * inv_l - mean * mean
    scale = g * jax.lax.rsqrt(var + EPS)
    shift = b - mean * scale
    return jnp.tanh(y * scale + shift)


def _stack_taps(y, L):
    """Build the pad=1, k=3 im2col operand [3*C, L] from y [C, L] in registers.

    Row block k holds in[:, i + k - 1] with zero boundary columns — generated
    with pltpu.roll (XLU) + a lane-index mask, no VMEM scratch round-trip.
    """
    lane = jax.lax.broadcasted_iota(jnp.int32, y.shape, 1)
    zero = jnp.float32(0.0)
    y_prev = jnp.where(lane == 0, zero, pltpu.roll(y, shift=1, axis=1))      # in[i-1]
    y_next = jnp.where(lane == L - 1, zero, pltpu.roll(y, shift=L - 1, axis=1))  # in[i+1]
    return jnp.concatenate([y_prev, y, y_next], axis=0)                       # [3C, L]


def _convnet1d_kernel(xs_ref, w1_ref, g1_ref, b1_ref,
                      w2_ref, g2_ref, b2_ref,
                      w3_ref, b3_ref, out_ref):
    # xs_ref: [3*Cs, L] f32 (tap-stacked, bc-padded input)
    # w1_ref: [H, 3*Cs] bf16   g1/b1: [H, 1] f32
    # w2_ref: [H, 3*H]  bf16   g2/b2: [H, 1] f32
    # w3_ref: [Cs, 3*H] bf16   b3:    [Cs, 1] f32
    # out_ref: [Cs, L] f32
    L = out_ref.shape[1]
    inv_l = jnp.float32(1.0 / L)

    # ---- conv1: valid (padding=0), no bias — single MXU pass ---------------
    y = jnp.dot(w1_ref[...], xs_ref[...].astype(jnp.bfloat16),
                preferred_element_type=jnp.float32)                  # [H, L]
    y = _bn_tanh(y, g1_ref[...], b1_ref[...], inv_l)

    # ---- conv2: same (padding=1), no bias — single MXU pass ----------------
    y = jnp.dot(w2_ref[...], _stack_taps(y, L).astype(jnp.bfloat16),
                preferred_element_type=jnp.float32)                  # [H, L]
    y = _bn_tanh(y, g2_ref[...], b2_ref[...], inv_l)

    # ---- conv3: same (padding=1), with bias — single MXU pass --------------
    out = jnp.dot(w3_ref[...], _stack_taps(y, L).astype(jnp.bfloat16),
                  preferred_element_type=jnp.float32)                # [Cs, L]
    out_ref[...] = out + b3_ref[...]


def _fold_weight(w):
    """[Cout, Cin, 3] -> [Cout, 3*Cin] (k-major, cin-minor), bf16 MXU operand."""
    cout, cin, k = w.shape
    return jnp.transpose(w, (0, 2, 1)).reshape(cout, k * cin).astype(jnp.bfloat16)


def convnet1d_forward(t, x, bc, params):
    """x: [1, Cs, L], bc: [1, Cs, 2]  ->  [1, Cs, L]  (float32)."""
    del t  # unused, matches torch forward(t, x)
    Cs, L = x.shape[1], x.shape[2]
    H = params["w1"].shape[0]

    # Boundary-condition concat (the torch.cat) + im2col tap-stacking stay in
    # JAX glue; the kernel sees a lane-dense [3*Cs, L] slab.
    xpad = jnp.concatenate([bc[:1, :, :1], x[:1], bc[:1, :, 1:]], axis=2)[0]  # [Cs, L+2]
    xpad = xpad.astype(jnp.float32)
    xstack = jnp.concatenate(
        [xpad[:, 0:L], xpad[:, 1:L + 1], xpad[:, 2:L + 2]], axis=0)           # [3*Cs, L]

    w1 = _fold_weight(params["w1"])                                           # [H, 3*Cs]
    w2 = _fold_weight(params["w2"])                                           # [H, 3*H]
    w3 = _fold_weight(params["w3"])                                           # [Cs, 3*H]
    g1 = params["g1"].reshape(H, 1).astype(jnp.float32)
    b1 = params["b1"].reshape(H, 1).astype(jnp.float32)
    g2 = params["g2"].reshape(H, 1).astype(jnp.float32)
    b2 = params["b2"].reshape(H, 1).astype(jnp.float32)
    b3 = params["b3"].reshape(Cs, 1).astype(jnp.float32)

    # TODO(synk): the torch module pins batch to 1 via the bc[:1] concat, so
    # there is no batched axis to shard across the two v7x TensorCores; with a
    # batched ODE-solver wrapper, add grid=(B,) + dimension_semantics=("parallel",).
    vmem = pl.BlockSpec(memory_space=pltpu.MemorySpace.VMEM)
    out2d = pl.pallas_call(
        _convnet1d_kernel,
        out_shape=jax.ShapeDtypeStruct((Cs, L), jnp.float32),
        in_specs=[vmem] * 9,
        out_specs=vmem,
    )(xstack, w1, g1, b1, w2, g2, b2, w3, b3)

    return out2d[None]                                                        # [1, Cs, L]


def convnet1d_reference(t, x, bc, params):
    """Pure-JAX reference (lax.conv, HIGHEST precision) with identical semantics."""
    del t
    xpad = jnp.concatenate([bc[:1, :, :1], x[:1], bc[:1, :, 1:]], axis=2)

    def conv(v, w, pad):
        return jax.lax.conv_general_dilated(
            v, w, window_strides=(1,), padding=[(pad, pad)],
            dimension_numbers=("NCH", "OIH", "NCH"),
            precision=jax.lax.Precision.HIGHEST)

    def bn(v, g, b):
        mean = jnp.mean(v, axis=(0, 2), keepdims=True)
        var = jnp.mean((v - mean) ** 2, axis=(0, 2), keepdims=True)
        return (v - mean) / jnp.sqrt(var + EPS) * g[None, :, None] + b[None, :, None]

    y = conv(xpad, params["w1"], 0)
    y = jnp.tanh(bn(y, params["g1"], params["b1"]))
    y = conv(y, params["w2"], 1)
    y = jnp.tanh(bn(y, params["g2"], params["b2"]))
    y = conv(y, params["w3"], 1) + params["b3"][None, :, None]
    return y


if __name__ == "__main__":
    # Small shapes consistent with the module: batch=1 (forced by the bc
    # concat), state_c=4 channels, hidden=16.  L=128 keeps the lane axis dense.
    state_c, hidden, L = 4, 16, 128

    key = jax.random.PRNGKey(0)
    ks = jax.random.split(key, 10)
    params = {
        "w1": 0.3 * jax.random.normal(ks[0], (hidden, state_c, 3), jnp.float32),
        "g1": 1.0 + 0.1 * jax.random.normal(ks[1], (hidden,), jnp.float32),
        "b1": 0.1 * jax.random.normal(ks[2], (hidden,), jnp.float32),
        "w2": 0.2 * jax.random.normal(ks[3], (hidden, hidden, 3), jnp.float32),
        "g2": 1.0 + 0.1 * jax.random.normal(ks[4], (hidden,), jnp.float32),
        "b2": 0.1 * jax.random.normal(ks[5], (hidden,), jnp.float32),
        "w3": 0.2 * jax.random.normal(ks[6], (state_c, hidden, 3), jnp.float32),
        "b3": 0.1 * jax.random.normal(ks[7], (state_c,), jnp.float32),
    }
    bc = jax.random.normal(ks[8], (1, state_c, 2), jnp.float32)
    x = jax.random.normal(ks[9], (1, state_c, L), jnp.float32)
    t = jnp.float32(0.0)  # unused, matches forward(t, x) signature

    out = jax.block_until_ready(convnet1d_forward(t, x, bc, params))
    ref = jax.block_until_ready(convnet1d_reference(t, x, bc, params))

    assert out.shape == (1, state_c, L), out.shape
    # Kernel matmuls use bf16 MXU operands (f32 accumulation); tolerance is set
    # accordingly vs. the HIGHEST-precision f32 reference.
    max_err = jnp.max(jnp.abs(out - ref))
    assert jnp.allclose(out, ref, rtol=2e-2, atol=2e-2), f"max abs err {max_err}"

    print("KERNEL_OK")
</pallas_src>

<mosaic_0001>
module attributes {stable_mosaic.version = 11 : i64} {
  func.func @_convnet1d_kernel(%arg0: memref<12x128xf32, #tpu.memory_space<vmem>>, %arg1: memref<16x12xbf16, #tpu.memory_space<vmem>>, %arg2: memref<16x1xf32, #tpu.memory_space<vmem>>, %arg3: memref<16x1xf32, #tpu.memory_space<vmem>>, %arg4: memref<16x48xbf16, #tpu.memory_space<vmem>>, %arg5: memref<16x1xf32, #tpu.memory_space<vmem>>, %arg6: memref<16x1xf32, #tpu.memory_space<vmem>>, %arg7: memref<4x48xbf16, #tpu.memory_space<vmem>>, %arg8: memref<4x1xf32, #tpu.memory_space<vmem>>, %arg9: memref<4x128xf32, #tpu.memory_space<vmem>>) attributes {dimension_semantics = [], scalar_prefetch = 0 : i64, scratch_operands = 0 : i64, tpu.core_type = #tpu.core_type<tc>} {
    %c0 = arith.constant 0 : index
    %c0_0 = arith.constant 0 : index
    %0 = vector.load %arg1[%c0, %c0_0] : memref<16x12xbf16, #tpu.memory_space<vmem>>, vector<16x12xbf16>
    %c0_1 = arith.constant 0 : index
    %c0_2 = arith.constant 0 : index
    %1 = vector.load %arg0[%c0_1, %c0_2] : memref<12x128xf32, #tpu.memory_space<vmem>>, vector<12x128xf32>
    %2 = arith.truncf %1 : vector<12x128xf32> to vector<12x128xbf16>
    %cst = arith.constant dense<0.000000e+00> : vector<16x128xf32>
    %3 = tpu.matmul %0, %2, %cst {dimension_numbers = #tpu.dot_dimension_numbers<[1], [0], [0], [1], [0, 0, 1, 1], [], []>} : vector<16x12xbf16>, vector<12x128xbf16>, vector<16x128xf32> -> vector<16x128xf32>
    %c0_3 = arith.constant 0 : index
    %c0_4 = arith.constant 0 : index
    %4 = vector.load %arg2[%c0_3, %c0_4] : memref<16x1xf32, #tpu.memory_space<vmem>>, vector<16x1xf32>
    %c0_5 = arith.constant 0 : index
    %c0_6 = arith.constant 0 : index
    %5 = vector.load %arg3[%c0_5, %c0_6] : memref<16x1xf32, #tpu.memory_space<vmem>>, vector<16x1xf32>
    %cst_7 = arith.constant dense<0.000000e+00> : vector<16xf32>
    %6 = vector.multi_reduction <add>, %3, %cst_7 [1] : vector<16x128xf32> to vector<16xf32>
    %7 = vector.shape_cast %6 : vector<16xf32> to vector<16x1xf32>
    %8 = arith.mulf %3, %3 : vector<16x128xf32>
    %cst_8 = arith.constant dense<0.000000e+00> : vector<16xf32>
    %9 = vector.multi_reduction <add>, %8, %cst_8 [1] : vector<16x128xf32> to vector<16xf32>
    %10 = vector.shape_cast %9 : vector<16xf32> to vector<16x1xf32>
    %cst_9 = arith.constant 7.812500e-03 : f32
    %11 = vector.broadcast %cst_9 : f32 to vector<16x1xf32>
    %12 = arith.mulf %7, %11 : vector<16x1xf32>
    %cst_10 = arith.constant 7.812500e-03 : f32
    %13 = vector.broadcast %cst_10 : f32 to vector<16x1xf32>
    %14 = arith.mulf %10, %13 : vector<16x1xf32>
    %15 = arith.mulf %12, %12 : vector<16x1xf32>
    %16 = arith.subf %14, %15 : vector<16x1xf32>
    %cst_11 = arith.constant 9.99999974E-6 : f32
    %17 = vector.broadcast %cst_11 : f32 to vector<16x1xf32>
    %18 = arith.addf %16, %17 : vector<16x1xf32>
    %19 = math.rsqrt %18 : vector<16x1xf32>
    %20 = arith.mulf %4, %19 : vector<16x1xf32>
    %21 = arith.mulf %12, %20 : vector<16x1xf32>
    %22 = arith.subf %5, %21 : vector<16x1xf32>
    %23 = vector.broadcast %20 : vector<16x1xf32> to vector<16x128xf32>
    %24 = arith.mulf %3, %23 : vector<16x128xf32>
    %25 = vector.broadcast %22 : vector<16x1xf32> to vector<16x128xf32>
    %26 = arith.addf %24, %25 : vector<16x128xf32>
    %27 = math.tanh %26 : vector<16x128xf32>
    %c0_12 = arith.constant 0 : index
    %c0_13 = arith.constant 0 : index
    %28 = vector.load %arg4[%c0_12, %c0_13] : memref<16x48xbf16, #tpu.memory_space<vmem>>, vector<16x48xbf16>
    %29 = tpu.iota {dimensions = array<i32: 1>} : vector<16x128xi32>
    %c0_i32 = arith.constant 0 : i32
    %30 = vector.broadcast %c0_i32 : i32 to vector<16x128xi32>
    %31 = arith.cmpi eq, %29, %30 : vector<16x128xi32>
    %c1_i32 = arith.constant 1 : i32
    %32 = tpu.dynamic_rotate %27 by %c1_i32 dim 1 : vector<16x128xf32>, i32 -> vector<16x128xf32>
    %cst_14 = arith.constant 0.000000e+00 : f32
    %33 = vector.broadcast %cst_14 : f32 to vector<16x128xf32>
    %34 = arith.select %31, %33, %32 : vector<16x128xi1>, vector<16x128xf32>
    %c127_i32 = arith.constant 127 : i32
    %35 = vector.broadcast %c127_i32 : i32 to vector<16x128xi32>
    %36 = arith.cmpi eq, %29, %35 : vector<16x128xi32>
    %c127_i32_15 = arith.constant 127 : i32
    %37 = tpu.dynamic_rotate %27 by %c127_i32_15 dim 1 : vector<16x128xf32>, i32 -> vector<16x128xf32>
    %cst_16 = arith.constant 0.000000e+00 : f32
    %38 = vector.broadcast %cst_16 : f32 to vector<16x128xf32>
    %39 = arith.select %36, %38, %37 : vector<16x128xi1>, vector<16x128xf32>
    %40 = tpu.concatenate %34, %27, %39 in 0 : vector<16x128xf32>, vector<16x128xf32>, vector<16x128xf32> -> vector<48x128xf32>
    %41 = arith.truncf %40 : vector<48x128xf32> to vector<48x128xbf16>
    %cst_17 = arith.constant dense<0.000000e+00> : vector<16x128xf32>
    %42 = tpu.matmul %28, %41, %cst_17 {dimension_numbers = #tpu.dot_dimension_numbers<[1], [0], [0], [1], [0, 0, 1, 1], [], []>} : vector<16x48xbf16>, vector<48x128xbf16>, vector<16x128xf32> -> vector<16x128xf32>
    %c0_18 = arith.constant 0 : index
    %c0_19 = arith.constant 0 : index
    %43 = vector.load %arg5[%c0_18, %c0_19] : memref<16x1xf32, #tpu.memory_space<vmem>>, vector<16x1xf32>
    %c0_20 = arith.constant 0 : index
    %c0_21 = arith.constant 0 : index
    %44 = vector.load %arg6[%c0_20, %c0_21] : memref<16x1xf32, #tpu.memory_space<vmem>>, vector<16x1xf32>
    %cst_22 = arith.constant dense<0.000000e+00> : vector<16xf32>
    %45 = vector.multi_reduction <add>, %42, %cst_22 [1] : vector<16x128xf32> to vector<16xf32>
    %46 = vector.shape_cast %45 : vector<16xf32> to vector<16x1xf32>
    %47 = arith.mulf %42, %42 : vector<16x128xf32>
    %cst_23 = arith.constant dense<0.000000e+00> : vector<16xf32>
    %48 = vector.multi_reduction <add>, %47, %cst_23 [1] : vector<16x128xf32> to vector<16xf32>
    %49 = vector.shape_cast %48 : vector<16xf32> to vector<16x1xf32>
    %cst_24 = arith.constant 7.812500e-03 : f32
    %50 = vector.broadcast %cst_24 : f32 to vector<16x1xf32>
    %51 = arith.mulf %46, %50 : vector<16x1xf32>
    %cst_25 = arith.constant 7.812500e-03 : f32
    %52 = vector.broadcast %cst_25 : f32 to vector<16x1xf32>
    %53 = arith.mulf %49, %52 : vector<16x1xf32>
    %54 = arith.mulf %51, %51 : vector<16x1xf32>
    %55 = arith.subf %53, %54 : vector<16x1xf32>
    %cst_26 = arith.constant 9.99999974E-6 : f32
    %56 = vector.broadcast %cst_26 : f32 to vector<16x1xf32>
    %57 = arith.addf %55, %56 : vector<16x1xf32>
    %58 = math.rsqrt %57 : vector<16x1xf32>
    %59 = arith.mulf %43, %58 : vector<16x1xf32>
    %60 = arith.mulf %51, %59 : vector<16x1xf32>
    %61 = arith.subf %44, %60 : vector<16x1xf32>
    %62 = vector.broadcast %59 : vector<16x1xf32> to vector<16x128xf32>
    %63 = arith.mulf %42, %62 : vector<16x128xf32>
    %64 = vector.broadcast %61 : vector<16x1xf32> to vector<16x128xf32>
    %65 = arith.addf %63, %64 : vector<16x128xf32>
    %66 = math.tanh %65 : vector<16x128xf32>
    %c0_27 = arith.constant 0 : index
    %c0_28 = arith.constant 0 : index
    %67 = vector.load %arg7[%c0_27, %c0_28] : memref<4x48xbf16, #tpu.memory_space<vmem>>, vector<4x48xbf16>
    %68 = tpu.iota {dimensions = array<i32: 1>} : vector<16x128xi32>
    %c0_i32_29 = arith.constant 0 : i32
    %69 = vector.broadcast %c0_i32_29 : i32 to vector<16x128xi32>
    %70 = arith.cmpi eq, %68, %69 : vector<16x128xi32>
    %c1_i32_30 = arith.constant 1 : i32
    %71 = tpu.dynamic_rotate %66 by %c1_i32_30 dim 1 : vector<16x128xf32>, i32 -> vector<16x128xf32>
    %cst_31 = arith.constant 0.000000e+00 : f32
    %72 = vector.broadcast %cst_31 : f32 to vector<16x128xf32>
    %73 = arith.select %70, %72, %71 : vector<16x128xi1>, vector<16x128xf32>
    %c127_i32_32 = arith.constant 127 : i32
    %74 = vector.broadcast %c127_i32_32 : i32 to vector<16x128xi32>
    %75 = arith.cmpi eq, %68, %74 : vector<16x128xi32>
    %c127_i32_33 = arith.constant 127 : i32
    %76 = tpu.dynamic_rotate %66 by %c127_i32_33 dim 1 : vector<16x128xf32>, i32 -> vector<16x128xf32>
    %cst_34 = arith.constant 0.000000e+00 : f32
    %77 = vector.broadcast %cst_34 : f32 to vector<16x128xf32>
    %78 = arith.select %75, %77, %76 : vector<16x128xi1>, vector<16x128xf32>
    %79 = tpu.concatenate %73, %66, %78 in 0 : vector<16x128xf32>, vector<16x128xf32>, vector<16x128xf32> -> vector<48x128xf32>
    %80 = arith.truncf %79 : vector<48x128xf32> to vector<48x128xbf16>
    %cst_35 = arith.constant dense<0.000000e+00> : vector<4x128xf32>
    %81 = tpu.matmul %67, %80, %cst_35 {dimension_numbers = #tpu.dot_dimension_numbers<[1], [0], [0], [1], [0, 0, 1, 1], [], []>} : vector<4x48xbf16>, vector<48x128xbf16>, vector<4x128xf32> -> vector<4x128xf32>
    %c0_36 = arith.constant 0 : index
    %c0_37 = arith.constant 0 : index
    %82 = vector.load %arg8[%c0_36, %c0_37] : memref<4x1xf32, #tpu.memory_space<vmem>>, vector<4x1xf32>
    %83 = vector.broadcast %82 : vector<4x1xf32> to vector<4x128xf32>
    %84 = arith.addf %81, %83 : vector<4x128xf32>
    %c0_38 = arith.constant 0 : index
    %c0_39 = arith.constant 0 : index
    %85 = vector.load %arg9[%c0_38, %c0_39] : memref<4x128xf32, #tpu.memory_space<vmem>>, vector<4x128xf32>
    tpu.vector_store %arg9[%c0_38, %c0_39], %84 {strides = array<i32>} : memref<4x128xf32, #tpu.memory_space<vmem>>, vector<4x128xf32>,
    return
  }
}

</mosaic_0001>

<llo_original>
// kernel: tpu_custom_call.1
$region0: #{tpu_custom_call.1}
  #allocation0 [shape = 'u32[]', space=smem, size = 0x4, offset = 0x4, fixed_abs, tag = 'smem constant byte address 0x4 - core index']
  #allocation1 [shape = 'u32[144,128]{1,0:T(1,128)}', space=vmem, size = 0x12000, scoped, tag = 'internal scratch']
  %s0 = inlined_call_operand.vmem [shape: f32[12,128], index: 0, kind: input, shape index: {}]
  %s1 = inlined_call_operand.vmem [shape: bf16[16,12], index: 1, kind: input, shape index: {}]
  %s2 = inlined_call_operand.vmem [shape: f32[16,1], index: 2, kind: input, shape index: {}]
  %s3 = inlined_call_operand.vmem [shape: f32[16,1], index: 3, kind: input, shape index: {}]
  %s4 = inlined_call_operand.vmem [shape: bf16[16,48], index: 4, kind: input, shape index: {}]
  %s5 = inlined_call_operand.vmem [shape: f32[16,1], index: 5, kind: input, shape index: {}]
  %s6 = inlined_call_operand.vmem [shape: f32[16,1], index: 6, kind: input, shape index: {}]
  %s7 = inlined_call_operand.vmem [shape: bf16[4,48], index: 7, kind: input, shape index: {}]
  %s8 = inlined_call_operand.vmem [shape: f32[4,1], index: 8, kind: input, shape index: {}]
  %s9 = inlined_call_operand.hbm [shape: f32[4,128], index: 9, kind: output, shape index: {}]
  %s10 = sld [smem:[#allocation0]]
  $region46: #{tpu_custom_call.1} parent=0
    _
  %s12 = ssub.s32 1, %s10
  %s13 = scalar_select 0, %s12, %s10
  $region1: #{tpu_custom_call.1} parent=0
    #allocation2 [shape = 'u8[2048]{0}', space=vmem, size = 0x800, scoped, tag = 'output window, operand 0, single buffered']
    #allocation3 [shape = 's32[1]{0}', space=sflag, size = 0x4, scoped, tag = 'scoped memory for tpu_custom_call.1']
    %14 = vsyncpa [#allocation3], 0
    // Predicated region
    $region2: #{tpu_custom_call.1} parent=1 // pred_check
      _
    $region3: #{tpu_custom_call.1} parent=1 // pred_check_branch
      %16 = sbr.rel (0) target = $region5
    $region4: #{tpu_custom_call.1} parent=1 // pred_region
      _
    $region5: #{tpu_custom_call.1} parent=1 // pred_fallthru
      _
    // Predicated region
    $region6: #{tpu_custom_call.1} parent=1 // pred_check
      _
    $region7: #{tpu_custom_call.1} parent=1 // pred_check_branch
      %18 = sbr.rel (0) target = $region9
    $region8: #{tpu_custom_call.1} parent=1 // pred_region
      _
    $region9: #{tpu_custom_call.1} parent=1 // pred_fallthru
      _
    // Predicated region
    $region10: #{tpu_custom_call.1} parent=1 // pred_check
      _
    $region11: #{tpu_custom_call.1} parent=1 // pred_check_branch
      %20 = sbr.rel (0) target = $region13
    $region12: #{tpu_custom_call.1} parent=1 // pred_region
      _
    $region13: #{tpu_custom_call.1} parent=1 // pred_fallthru
      _
    // Predicated region
    $region14: #{tpu_custom_call.1} parent=1 // pred_check
      _
    $region15: #{tpu_custom_call.1} parent=1 // pred_check_branch
      %22 = sbr.rel (0) target = $region17
    $region16: #{tpu_custom_call.1} parent=1 // pred_region
      _
    $region17: #{tpu_custom_call.1} parent=1 // pred_fallthru
      _
    // Predicated region
    $region18: #{tpu_custom_call.1} parent=1 // pred_check
      _
    $region19: #{tpu_custom_call.1} parent=1 // pred_check_branch
      %24 = sbr.rel (0) target = $region21
    $region20: #{tpu_custom_call.1} parent=1 // pred_region
      _
    $region21: #{tpu_custom_call.1} parent=1 // pred_fallthru
      _
    // Predicated region
    $region22: #{tpu_custom_call.1} parent=1 // pred_check
      _
    $region23: #{tpu_custom_call.1} parent=1 // pred_check_branch
      %26 = sbr.rel (0) target = $region25
    $region24: #{tpu_custom_call.1} parent=1 // pred_region
      _
    $region25: #{tpu_custom_call.1} parent=1 // pred_fallthru
      _
    // Predicated region
    $region26: #{tpu_custom_call.1} parent=1 // pred_check
      _
    $region27: #{tpu_custom_call.1} parent=1 // pred_check_branch
      %28 = sbr.rel (0) target = $region29
    $region28: #{tpu_custom_call.1} parent=1 // pred_region
      _
    $region29: #{tpu_custom_call.1} parent=1 // pred_fallthru
      _
    // Predicated region
    $region30: #{tpu_custom_call.1} parent=1 // pred_check
      _
    $region31: #{tpu_custom_call.1} parent=1 // pred_check_branch
      %30 = sbr.rel (0) target = $region33
    $region32: #{tpu_custom_call.1} parent=1 // pred_region
      _
    $region33: #{tpu_custom_call.1} parent=1 // pred_fallthru
      _
    // Predicated region
    $region34: #{tpu_custom_call.1} parent=1 // pred_check
      _
    $region35: #{tpu_custom_call.1} parent=1 // pred_check_branch
      %32 = sbr.rel (0) target = $region37
    $region36: #{tpu_custom_call.1} parent=1 // pred_region
      _
    $region37: #{tpu_custom_call.1} parent=1 // pred_fallthru
      _
    %v34 = vld [vmem:[%s1] sm:$0xf]
    %v35 = vld [vmem:[%s1 + $0x4] sm:$0xf]
    %v36 = vld [vmem:[%s0] sm:$0xff]
    %v37 = vld [vmem:[%s0 + $0x8] sm:$0xf]
    %v38 = vpack.c.bf16 %v37, %v36
    %v41 = vunpack.c.l.b16 %v34
    %v42 = vunpack.c.l.b16 %v35
    %v43 = vpack.c.b16 %v42, %v41
    %vm44 = vcmask 97280
    %v46 = vsel %vm44, %v43, 0
    %vm48 = vcmask 1045504
    %v50 = vsel %vm48, %v38, 0
    %52 = vmatprep.subr.bf16.mxu0 0
    %53 = vmatpush1.bf16.msra.mxu0 %v50
    %54 = vmatprep.subr.bf16.mxu0 0
    %55 = vmatpush1.bf16.msra.mxu0 0
    %56 = vmatprep.subr.bf16.mxu0 0
    %57 = vmatpush1.bf16.msra.mxu0 0
    %58 = vmatprep.subr.bf16.mxu0 0
    %59 = vmatpush1.bf16.msra.mxu0 0
    %60 = vmatprep.subr.bf16.mxu0 0
    %61 = vmatpush1.bf16.msra.mxu0 0
    %62 = vmatprep.subr.bf16.mxu0 0
    %63 = vmatpush1.bf16.msra.mxu0 0
    %64 = vmatprep.subr.bf16.mxu0 0
    %65 = vmatpush1.bf16.msra.mxu0 0
    %66 = vmatprep.subr.bf16.mxu0 0
    %67 = vmatpush1.bf16.msra.mxu0 0
    %68 = vmatprep.subr.bf16.mxu0 0
    %69 = vmatpush1.bf16.msra.mxu0 0
    %70 = vmatprep.subr.bf16.mxu0 0
    %71 = vmatpush1.bf16.msra.mxu0 0
    %72 = vmatprep.subr.bf16.mxu0 0
    %73 = vmatpush1.bf16.msra.mxu0 0
    %74 = vmatprep.subr.bf16.mxu0 0
    %75 = vmatpush1.bf16.msra.mxu0 0
    %76 = vmatprep.subr.bf16.mxu0 0
    %77 = vmatpush1.bf16.msra.mxu0 0
    %78 = vmatprep.subr.bf16.mxu0 0
    %79 = vmatpush1.bf16.msra.mxu0 0
    %80 = vmatprep.subr.bf16.mxu0 0
    %81 = vmatpush1.bf16.msra.mxu0 0
    %82 = vmatprep.subr.bf16.mxu0 0
    %83 = vmatpush1.bf16.msra.mxu0 0
    %84 = vmatprep.mubr.bf16.mxu0 0
    %85 = vmatmul.mubr.bf16.gmra.mrb[0].mxu0 %v46
    %v86 = vpop.f32.mrb[0].mxu0
    %v87 = vadd.f32 0.0, %v86
    %v88 = vpop.f32.mrb[0].mxu0
    %v89 = vpop.f32.mrb[0].mxu0
    %v90 = vadd.f32 0.0, %v89
    %v91 = vpop.f32.mrb[0].mxu0
    %92 = vdwg.mxu0
    %v93 = vld [vmem:[%s2] sm:$0xff]
    %v94 = vld [vmem:[%s2 + $0x8] sm:$0xff]
    %v95 = vld [vmem:[%s3] sm:$0xff]
    %v96 = vld [vmem:[%s3 + $0x8] sm:$0xff]
    %97 = vadd.xlane.f32.xlu0 %v87
    %v98 = vpop.xlane.xlu0 %97
    %99 = vadd.xlane.f32.xlu0 %v90
    %v100 = vpop.xlane.xlu0 %99
    %v101 = vmul.f32 %v87, %v87
    %v102 = vmul.f32 %v90, %v90
    %103 = vadd.xlane.f32.xlu0 %v101
    %v104 = vpop.xlane.xlu0 %103
    %105 = vadd.xlane.f32.xlu0 %v102
    %v106 = vpop.xlane.xlu0 %105
    %v107 = vmul.f32 %v98, 0.0078125
    %v108 = vmul.f32 %v100, 0.0078125
    %v109 = vmul.f32 %v104, 0.0078125
    %v110 = vmul.f32 %v106, 0.0078125
    %v111 = vmul.f32 %v107, %v107
    %v112 = vmul.f32 %v108, %v108
    %v113 = vsub.f32 %v109, %v111
    %v114 = vsub.f32 %v110, %v112
    %v115 = vadd.f32 %v113, 1e-05
    %v116 = vadd.f32 %v114, 1e-05
    %v117 = vrsqrt.pop %v115
    %v118 = vrsqrt.pop %v116
    %v119 = vmul.f32 %v93, %v117
    %v120 = vmul.f32 %v94, %v118
    %v121 = vmul.f32 %v107, %v119
    %v122 = vmul.f32 %v108, %v120
    %v123 = vsub.f32 %v95, %v121
    %v124 = vsub.f32 %v96, %v122
    %126 = vset.pattern.permute.xlu0 0
    %127 = vperm.xlu0 %126, %v119
    %v128 = vpop.permute.xlu0 %127
    %131 = vset.pattern.permute.xlu0 0
    %132 = vperm.xlu0 %131, %v120
    %v133 = vpop.permute.xlu0 %132
    %v135 = vmul.f32 %v87, %v128
    %v136 = vmul.f32 %v90, %v133
    %138 = vset.pattern.permute.xlu0 0
    %139 = vperm.xlu0 %138, %v123
    %v140 = vpop.permute.xlu0 %139
    %143 = vset.pattern.permute.xlu0 0
    %144 = vperm.xlu0 %143, %v124
    %v145 = vpop.permute.xlu0 %144
    %v147 = vadd.f32 %v135, %v140
    %v148 = vadd.f32 %v136, %v145
    %v149 = vtanh.pop %v147
    %v150 = vtanh.pop %v148
    %v151 = vld [vmem:[%s4] sm:$0xf]
    %v152 = vld [vmem:[%s4 + $0x4] sm:$0xf]
    %v153 = vlaneseq
    %v154 = vand.u32 %v153, 127
    %vm155 = vcmp.eq.s32.totalorder %v154, 0
    %156 = vrot.lane.b32.xlu0 %v149, 1
    %v157 = vpop.permute.xlu0 %156
    %158 = vrot.lane.b32.xlu0 %v150, 1
    %v159 = vpop.permute.xlu0 %158
    %v160 = vsel %vm155, 0.0, %v157
    %v161 = vsel %vm155, 0.0, %v159
    %vm162 = vcmp.eq.s32.totalorder %v154, 127
    %163 = vrot.lane.b32.xlu0 %v149, 127
    %v164 = vpop.permute.xlu0 %163
    %165 = vrot.lane.b32.xlu0 %v150, 127
    %v166 = vpop.permute.xlu0 %165
    %v167 = vsel %vm162, 0.0, %v164
    %v168 = vsel %vm162, 0.0, %v166
    %v169 = vpack.c.bf16 %v161, %v160
    %v170 = vpack.c.bf16 %v150, %v149
    %v171 = vpack.c.bf16 %v168, %v167
    %v174 = vunpack.c.l.b16 %v151
    %v175 = vunpack.c.l.b16 %v152
    %v176 = vpack.c.b16 %v175, %v174
    %vm177 = vcmask 392192
    %v179 = vsel %vm177, %v176, 0
    %181 = vmatprep.subr.bf16.mxu0 0
    %182 = vmatpush1.bf16.msra.mxu0 %v169
    %183 = vmatprep.subr.bf16.mxu0 0
    %184 = vmatpush1.bf16.msra.mxu0 %v170
    %185 = vmatprep.subr.bf16.mxu0 0
    %186 = vmatpush1.bf16.msra.mxu0 %v171
    %187 = vmatprep.subr.bf16.mxu0 0
    %188 = vmatpush1.bf16.msra.mxu0 0
    %189 = vmatprep.subr.bf16.mxu0 0
    %190 = vmatpush1.bf16.msra.mxu0 0
    %191 = vmatprep.subr.bf16.mxu0 0
    %192 = vmatpush1.bf16.msra.mxu0 0
    %193 = vmatprep.subr.bf16.mxu0 0
    %194 = vmatpush1.bf16.msra.mxu0 0
    %195 = vmatprep.subr.bf16.mxu0 0
    %196 = vmatpush1.bf16.msra.mxu0 0
    %197 = vmatprep.subr.bf16.mxu0 0
    %198 = vmatpush1.bf16.msra.mxu0 0
    %199 = vmatprep.subr.bf16.mxu0 0
    %200 = vmatpush1.bf16.msra.mxu0 0
    %201 = vmatprep.subr.bf16.mxu0 0
    %202 = vmatpush1.bf16.msra.mxu0 0
    %203 = vmatprep.subr.bf16.mxu0 0
    %204 = vmatpush1.bf16.msra.mxu0 0
    %205 = vmatprep.subr.bf16.mxu0 0
    %206 = vmatpush1.bf16.msra.mxu0 0
    %207 = vmatprep.subr.bf16.mxu0 0
    %208 = vmatpush1.bf16.msra.mxu0 0
    %209 = vmatprep.subr.bf16.mxu0 0
    %210 = vmatpush1.bf16.msra.mxu0 0
    %211 = vmatprep.subr.bf16.mxu0 0
    %212 = vmatpush1.bf16.msra.mxu0 0
    %213 = vmatprep.mubr.bf16.mxu0 0
    %214 = vmatmul.mubr.bf16.gmra.mrb[0].mxu0 %v179
    %v215 = vpop.f32.mrb[0].mxu0
    %v216 = vadd.f32 0.0, %v215
    %v217 = vpop.f32.mrb[0].mxu0
    %v218 = vpop.f32.mrb[0].mxu0
    %v219 = vadd.f32 0.0, %v218
    %v220 = vpop.f32.mrb[0].mxu0
    %221 = vdwg.mxu0
    %v222 = vld [vmem:[%s5] sm:$0xff]
    %v223 = vld [vmem:[%s5 + $0x8] sm:$0xff]
    %v224 = vld [vmem:[%s6] sm:$0xff]
    %v225 = vld [vmem:[%s6 + $0x8] sm:$0xff]
    %226 = vadd.xlane.f32.xlu0 %v216
    %v227 = vpop.xlane.xlu0 %226
    %228 = vadd.xlane.f32.xlu0 %v219
    %v229 = vpop.xlane.xlu0 %228
    %v230 = vmul.f32 %v216, %v216
    %v231 = vmul.f32 %v219, %v219
    %232 = vadd.xlane.f32.xlu0 %v230
    %v233 = vpop.xlane.xlu0 %232
    %234 = vadd.xlane.f32.xlu0 %v231
    %v235 = vpop.xlane.xlu0 %234
    %v236 = vmul.f32 %v227, 0.0078125
    %v237 = vmul.f32 %v229, 0.0078125
    %v238 = vmul.f32 %v233, 0.0078125
    %v239 = vmul.f32 %v235, 0.0078125
    %v240 = vmul.f32 %v236, %v236
    %v241 = vmul.f32 %v237, %v237
    %v242 = vsub.f32 %v238, %v240
    %v243 = vsub.f32 %v239, %v241
    %v244 = vadd.f32 %v242, 1e-05
    %v245 = vadd.f32 %v243, 1e-05
    %v246 = vrsqrt.pop %v244
    %v247 = vrsqrt.pop %v245
    %v248 = vmul.f32 %v222, %v246
    %v249 = vmul.f32 %v223, %v247
    %v250 = vmul.f32 %v236, %v248
    %v251 = vmul.f32 %v237, %v249
    %v252 = vsub.f32 %v224, %v250
    %v253 = vsub.f32 %v225, %v251
    %255 = vset.pattern.permute.xlu0 0
    %256 = vperm.xlu0 %255, %v248
    %v257 = vpop.permute.xlu0 %256
    %260 = vset.pattern.permute.xlu0 0
    %261 = vperm.xlu0 %260, %v249
    %v262 = vpop.permute.xlu0 %261
    %v264 = vmul.f32 %v216, %v257
    %v265 = vmul.f32 %v219, %v262
    %267 = vset.pattern.permute.xlu0 0
    %268 = vperm.xlu0 %267, %v252
    %v269 = vpop.permute.xlu0 %268
    %272 = vset.pattern.permute.xlu0 0
    %273 = vperm.xlu0 %272, %v253
    %v274 = vpop.permute.xlu0 %273
    %v276 = vadd.f32 %v264, %v269
    %v277 = vadd.f32 %v265, %v274
    %v278 = vtanh.pop %v276
    %v279 = vtanh.pop %v277
    %v280 = vld [vmem:[%s7] sm:$0x3]
    %281 = vrot.lane.b32.xlu0 %v278, 1
    %v282 = vpop.permute.xlu0 %281
    %283 = vrot.lane.b32.xlu0 %v279, 1
    %v284 = vpop.permute.xlu0 %283
    %v285 = vsel %vm155, 0.0, %v282
    %v286 = vsel %vm155, 0.0, %v284
    %287 = vrot.lane.b32.xlu0 %v278, 127
    %v288 = vpop.permute.xlu0 %287
    %289 = vrot.lane.b32.xlu0 %v279, 127
    %v290 = vpop.permute.xlu0 %289
    %v291 = vsel %vm162, 0.0, %v288
    %v292 = vsel %vm162, 0.0, %v290
    %v293 = vpack.c.bf16 %v286, %v285
    %v294 = vpack.c.bf16 %v279, %v278
    %v295 = vpack.c.bf16 %v292, %v291
    %v296 = vld [vmem:[%s8] sm:$0xf]
    %298 = vset.pattern.permute.xlu0 0
    %299 = vperm.xlu0 %298, %v296
    %v300 = vpop.permute.xlu0 %299
    %v303 = vsel %vm177, %v280, 0
    %305 = vmatprep.subr.bf16.mxu0 0
    %306 = vmatpush1.bf16.msra.mxu0 %v293
    %307 = vmatprep.subr.bf16.mxu0 0
    %308 = vmatpush1.bf16.msra.mxu0 %v294
    %309 = vmatprep.subr.bf16.mxu0 0
    %310 = vmatpush1.bf16.msra.mxu0 %v295
    %311 = vmatprep.subr.bf16.mxu0 0
    %312 = vmatpush1.bf16.msra.mxu0 0
    %313 = vmatprep.subr.bf16.mxu0 0
    %314 = vmatpush1.bf16.msra.mxu0 0
    %315 = vmatprep.subr.bf16.mxu0 0
    %316 = vmatpush1.bf16.msra.mxu0 0
    %317 = vmatprep.subr.bf16.mxu0 0
    %318 = vmatpush1.bf16.msra.mxu0 0
    %319 = vmatprep.subr.bf16.mxu0 0
    %320 = vmatpush1.bf16.msra.mxu0 0
    %321 = vmatprep.subr.bf16.mxu0 0
    %322 = vmatpush1.bf16.msra.mxu0 0
    %323 = vmatprep.subr.bf16.mxu0 0
    %324 = vmatpush1.bf16.msra.mxu0 0
    %325 = vmatprep.subr.bf16.mxu0 0
    %326 = vmatpush1.bf16.msra.mxu0 0
    %327 = vmatprep.subr.bf16.mxu0 0
    %328 = vmatpush1.bf16.msra.mxu0 0
    %329 = vmatprep.subr.bf16.mxu0 0
    %330 = vmatpush1.bf16.msra.mxu0 0
    %331 = vmatprep.subr.bf16.mxu0 0
    %332 = vmatpush1.bf16.msra.mxu0 0
    %333 = vmatprep.subr.bf16.mxu0 0
    %334 = vmatpush1.bf16.msra.mxu0 0
    %335 = vmatprep.subr.bf16.mxu0 0
    %336 = vmatpush1.bf16.msra.mxu0 0
    %337 = vmatprep.mubr.bf16.mxu0 0
    %338 = vmatmul.mubr.bf16.gmra.mrb[0].mxu0 %v303
    %v339 = vpop.f32.mrb[0].mxu0
    %v340 = vadd.f32 %v300, %v339
    %v341 = vpop.f32.mrb[0].mxu0
    %v342 = vpop.f32.mrb[0].mxu0
    %v343 = vpop.f32.mrb[0].mxu0
    %344 = vdwg.mxu0
    %345 = vst [vmem:[#allocation2] sm:$0xf] %v340
    // Predicated region
    $region38: #{tpu_custom_call.1} parent=1 // pred_check
      _
    $region39: #{tpu_custom_call.1} parent=1 // pred_check_branch
      %347 = sbr.rel (0) target = $region41
    $region40: #{tpu_custom_call.1} parent=1 // pred_region
      %s349 = ssub.s32 64, 64
      %350 = vsyncadd [#allocation3], %s349
      %s352 = sshll.u32 [#allocation2], 4
      %s353 = int_to_ptr.vmem [resolvable:$true] %s352
      %355 = dma.vmem_to_hbm [thread:$0]  %s353, 64, %s9, [#allocation3]
    $region41: #{tpu_custom_call.1} parent=1 // pred_fallthru
      _
    // Predicated region
    $region42: #{tpu_custom_call.1} parent=1 // pred_check
      _
    $region43: #{tpu_custom_call.1} parent=1 // pred_check_branch
      %357 = sbr.rel (0) target = $region45
    $region44: #{tpu_custom_call.1} parent=1 // pred_region
      %358 = dma.done [#allocation3], 64
    $region45: #{tpu_custom_call.1} parent=1 // pred_fallthru
      _
    %359 = vsyncpa [#allocation3], 1

</llo_original>
